<compile_context>
chip_gen: v7x
topology: tpu7x:2x2x1
jax: 0.10.0
libtpu: 0.0.40
codegen_flags: <defaults>
</compile_context>

<pallas_src>
import functools

import jax
import jax.numpy as jnp
from jax import lax
from jax.experimental import pallas as pl
from jax.experimental.pallas import tpu as pltpu


def _stats_pool_kernel(x_ref, out_ref, sum_scr, sq_scr, piv_scr, *,
                       mode, unbiased, t_total, tile_t):
    """One (batch-tile, T-tile) step of the fused stats-pooling reduction.

    x_ref:   [tile_b, C, tile_t] in the input dtype.
    out_ref: [tile_b, C] in the input dtype (written on the last T step).
    sum_scr / sq_scr / piv_scr: [tile_b, C] f32 running accumulators / pivot.
    """
    k = pl.program_id(1)
    nk = pl.num_programs(1)

    x = x_ref[...]  # native dtype; f32 promotion happens per-tile below.

    @pl.when(k == 0)
    def _init():
        # Pivot = mean of the first T tile (k==0 tile is never ragged).
        # Centering on it keeps the single-pass sum/sumsq formula far from
        # catastrophic cancellation even when |mean| >> std.
        piv_scr[...] = jnp.mean(x, axis=-1, dtype=jnp.float32)
        sum_scr[...] = jnp.zeros_like(sum_scr)
        sq_scr[...] = jnp.zeros_like(sq_scr)

    # Centered tile in f32 (the only tile-sized temporary; budgeted in the
    # wrapper's vmem_limit_bytes).
    xc = x.astype(jnp.float32) - piv_scr[...][..., None]
    if t_total % tile_t != 0:
        # Ragged last T tile: zero out-of-range lanes so they contribute 0.
        t_idx = k * tile_t + lax.broadcasted_iota(jnp.int32, xc.shape, 2)
        xc = jnp.where(t_idx < t_total, xc, 0.0)

    sum_scr[...] += jnp.sum(xc, axis=-1)
    sq_scr[...] += jnp.sum(xc * xc, axis=-1)

    @pl.when(k == nk - 1)
    def _finalize():
        inv_t = jnp.float32(1.0 / t_total)
        s = sum_scr[...]
        if mode == "mean":
            res = piv_scr[...] + s * inv_t
        else:
            m2 = jnp.maximum(sq_scr[...] - (s * s) * inv_t, 0.0)
            # NB: unbiased with t_total == 1 gives 0/0 = NaN, matching torch.var.
            denom = (t_total - 1) if unbiased else t_total
            res = m2 / jnp.float32(denom)
            if mode == "std":
                res = jnp.sqrt(res)
        out_ref[...] = res.astype(out_ref.dtype)


def stats_pooling_1d(x, mode="var", unbiased=True, per_buffer_budget_bytes=4 << 20):
    """Pallas StatsPooling1D.  x: [B, C, T].  Returns [B, C] in x.dtype."""
    assert x.ndim == 3, "StatsPooling1D expects [batch, channels, time]"
    assert mode in ("var", "std", "mean"), f"unsupported mode: {mode}"
    B, C, T = x.shape
    itemsize = x.dtype.itemsize

    # Generation-aware per-input-buffer budget (Pallas double-buffers inputs);
    # stays well under v7x's 64 MiB physical VMEM and v5e's defaults.
    try:
        vmem_cap = int(pltpu.get_tpu_info().vmem_capacity_bytes)
    except Exception:  # interpret mode / non-TPU tracing
        vmem_cap = 64 << 20
    budget = min(int(per_buffer_budget_bytes), max(1 << 20, vmem_cap // 16))

    # ---- tile_t: full T if a minimal batch slab fits, else a multiple of 128.
    min_b = B if B <= 8 else 8  # smallest batch block legal under the (8,128) rule
    if min_b * C * T * itemsize <= budget:
        tile_t = T
    else:
        tile_t = (budget // (min_b * C * itemsize)) // 128 * 128
        tile_t = int(max(128, tile_t))
        if tile_t >= T:
            tile_t = T
    grid_t = pl.cdiv(T, tile_t)

    # ---- tile_b: sized to the budget; if there is no T axis to pipeline over,
    # also cap it so the batch grid gives ~4 steps of DMA/compute overlap.
    row_block_bytes = C * tile_t * itemsize
    max_b = max(1, budget // row_block_bytes)
    if grid_t == 1:
        max_b = min(max_b, max(1, pl.cdiv(B, 4)))
    if max_b >= B:
        tile_b = B
    elif B <= 8:
        tile_b = B
    else:
        tile_b = max(8, (max_b // 8) * 8)  # output block rows: multiple of 8
    grid_b = pl.cdiv(B, tile_b)

    # Explicit VMEM limit: 2x double-buffered input + ~3 f32 tile temporaries
    # (centering / squaring) + scratch/output slack.
    block_elems = tile_b * C * tile_t
    block_bytes = block_elems * itemsize
    vmem_limit = 2 * block_bytes + 3 * block_elems * 4 + (4 << 20)
    vmem_limit = int(min(48 << 20, max(16 << 20, vmem_limit)))

    kernel = functools.partial(_stats_pool_kernel, mode=mode, unbiased=unbiased,
                               t_total=T, tile_t=tile_t)

    cost = pl.CostEstimate(
        flops=3 * B * C * T,
        transcendentals=0,
        bytes_accessed=B * C * T * itemsize + B * C * itemsize,
    )

    return pl.pallas_call(
        kernel,
        out_shape=jax.ShapeDtypeStruct((B, C), x.dtype),
        grid=(grid_b, grid_t),
        in_specs=[pl.BlockSpec((tile_b, C, tile_t), lambda i, k: (i, 0, k))],
        out_specs=pl.BlockSpec((tile_b, C), lambda i, k: (i, 0)),
        scratch_shapes=[
            pltpu.VMEM((tile_b, C), jnp.float32),  # running sum
            pltpu.VMEM((tile_b, C), jnp.float32),  # running sum of squares
            pltpu.VMEM((tile_b, C), jnp.float32),  # pivot
        ],
        compiler_params=pltpu.CompilerParams(
            dimension_semantics=("parallel", "arbitrary"),
            vmem_limit_bytes=vmem_limit,
        ),
        cost_estimate=cost,
    )(x)


def reference(x, mode="var", unbiased=True):
    """Pure-JAX reference matching torch.{mean,var,std}(x, dim=2)."""
    xf = x.astype(jnp.float32)
    if mode == "mean":
        return jnp.mean(xf, axis=2).astype(x.dtype)
    ddof = 1 if unbiased else 0
    v = jnp.var(xf, axis=2, ddof=ddof)
    if mode == "std":
        v = jnp.sqrt(v)
    return v.astype(x.dtype)


if __name__ == "__main__":
    key = jax.random.PRNGKey(0)

    # Small shapes consistent with the module: x = [batch=2, channels=4, time=16].
    B, C, T = 2, 4, 16
    x = jax.random.normal(key, (B, C, T), jnp.float32) * 2.0 + 3.0

    out = jax.block_until_ready(stats_pooling_1d(x))  # default mode='var'
    assert out.shape == (B, C)
    assert jnp.allclose(out, reference(x, mode="var"), atol=1e-4, rtol=1e-4), \
        "var mismatch vs reference"

    for mode in ("std", "mean"):
        o = jax.block_until_ready(stats_pooling_1d(x, mode=mode))
        assert jnp.allclose(o, reference(x, mode=mode), atol=1e-4, rtol=1e-4), \
            f"{mode} mismatch vs reference"

    # Exercise the T-tiled reduction path (multi-step accumulation + ragged
    # tail masking) by forcing a tiny per-buffer budget.
    x2 = jax.random.normal(jax.random.PRNGKey(1), (2, 8, 400), jnp.float32) + 5.0
    o2 = jax.block_until_ready(
        stats_pooling_1d(x2, per_buffer_budget_bytes=8 << 10))
    assert jnp.allclose(o2, reference(x2, mode="var"), atol=1e-4, rtol=1e-4), \
        "T-tiled var mismatch vs reference"

    print("KERNEL_OK")
</pallas_src>

<mosaic_0001>
module attributes {stable_mosaic.version = 11 : i64} {
  func.func @_stats_pool_kernel(%arg0: i32, %arg1: i32, %arg2: memref<2x4x16xf32, #tpu.memory_space<vmem>>, %arg3: memref<2x4xf32, #tpu.memory_space<vmem>>, %arg4: memref<2x4xf32, #tpu.memory_space<vmem>>, %arg5: memref<2x4xf32, #tpu.memory_space<vmem>>, %arg6: memref<2x4xf32, #tpu.memory_space<vmem>>) attributes {dimension_semantics = [#tpu.dimension_semantics<parallel>, #tpu.dimension_semantics<arbitrary>], iteration_bounds = array<i64: 1, 1>, scalar_prefetch = 0 : i64, scratch_operands = 3 : i64, tpu.core_type = #tpu.core_type<tc>, window_params = [{transform_indices = @transform_0, window_bounds = array<i64: 2, 4, 16>}, {transform_indices = @transform_1, window_bounds = array<i64: 2, 4>}]} {
    %c0 = arith.constant 0 : index
    %c0_0 = arith.constant 0 : index
    %c0_1 = arith.constant 0 : index
    %0 = vector.load %arg2[%c0, %c0_0, %c0_1] : memref<2x4x16xf32, #tpu.memory_space<vmem>>, vector<2x4x16xf32>
    %c0_i32 = arith.constant 0 : i32
    %1 = arith.cmpi eq, %arg1, %c0_i32 : i32
    %2 = arith.extui %1 : i1 to i32
    %c0_i32_2 = arith.constant 0 : i32
    %3 = arith.cmpi ne, %2, %c0_i32_2 : i32
    scf.if %3 {
      %cst_16 = arith.constant dense<0.000000e+00> : vector<2x4xf32>
      %20 = vector.multi_reduction <add>, %0, %cst_16 [2] : vector<2x4x16xf32> to vector<2x4xf32>
      %cst_17 = arith.constant 1.600000e+01 : f32
      %21 = vector.broadcast %cst_17 : f32 to vector<2x4xf32>
      %22 = arith.divf %20, %21 : vector<2x4xf32>
      %c0_18 = arith.constant 0 : index
      %c0_19 = arith.constant 0 : index
      %23 = vector.load %arg6[%c0_18, %c0_19] : memref<2x4xf32, #tpu.memory_space<vmem>>, vector<2x4xf32>
      tpu.vector_store %arg6[%c0_18, %c0_19], %22 {strides = array<i32>} : memref<2x4xf32, #tpu.memory_space<vmem>>, vector<2x4xf32>,
      %cst_20 = arith.constant 0.000000e+00 : f32
      %24 = vector.broadcast %cst_20 : f32 to vector<2x4xf32>
      %c0_21 = arith.constant 0 : index
      %c0_22 = arith.constant 0 : index
      %25 = vector.load %arg4[%c0_21, %c0_22] : memref<2x4xf32, #tpu.memory_space<vmem>>, vector<2x4xf32>
      tpu.vector_store %arg4[%c0_21, %c0_22], %24 {strides = array<i32>} : memref<2x4xf32, #tpu.memory_space<vmem>>, vector<2x4xf32>,
      %cst_23 = arith.constant 0.000000e+00 : f32
      %26 = vector.broadcast %cst_23 : f32 to vector<2x4xf32>
      %c0_24 = arith.constant 0 : index
      %c0_25 = arith.constant 0 : index
      %27 = vector.load %arg5[%c0_24, %c0_25] : memref<2x4xf32, #tpu.memory_space<vmem>>, vector<2x4xf32>
      tpu.vector_store %arg5[%c0_24, %c0_25], %26 {strides = array<i32>} : memref<2x4xf32, #tpu.memory_space<vmem>>, vector<2x4xf32>,
    } else {
    }
    %c0_3 = arith.constant 0 : index
    %c0_4 = arith.constant 0 : index
    %4 = vector.load %arg6[%c0_3, %c0_4] : memref<2x4xf32, #tpu.memory_space<vmem>>, vector<2x4xf32>
    %5 = vector.shape_cast %4 : vector<2x4xf32> to vector<2x4x1xf32>
    %6 = vector.broadcast %5 : vector<2x4x1xf32> to vector<2x4x16xf32>
    %7 = arith.subf %0, %6 : vector<2x4x16xf32>
    %c0_5 = arith.constant 0 : index
    %c0_6 = arith.constant 0 : index
    %8 = vector.load %arg4[%c0_5, %c0_6] : memref<2x4xf32, #tpu.memory_space<vmem>>, vector<2x4xf32>
    %cst = arith.constant dense<0.000000e+00> : vector<2x4xf32>
    %9 = vector.multi_reduction <add>, %7, %cst [2] : vector<2x4x16xf32> to vector<2x4xf32>
    %10 = arith.addf %8, %9 : vector<2x4xf32>
    %c0_7 = arith.constant 0 : index
    %c0_8 = arith.constant 0 : index
    %11 = vector.load %arg4[%c0_7, %c0_8] : memref<2x4xf32, #tpu.memory_space<vmem>>, vector<2x4xf32>
    tpu.vector_store %arg4[%c0_7, %c0_8], %10 {strides = array<i32>} : memref<2x4xf32, #tpu.memory_space<vmem>>, vector<2x4xf32>,
    %c0_9 = arith.constant 0 : index
    %c0_10 = arith.constant 0 : index
    %12 = vector.load %arg5[%c0_9, %c0_10] : memref<2x4xf32, #tpu.memory_space<vmem>>, vector<2x4xf32>
    %13 = arith.mulf %7, %7 : vector<2x4x16xf32>
    %cst_11 = arith.constant dense<0.000000e+00> : vector<2x4xf32>
    %14 = vector.multi_reduction <add>, %13, %cst_11 [2] : vector<2x4x16xf32> to vector<2x4xf32>
    %15 = arith.addf %12, %14 : vector<2x4xf32>
    %c0_12 = arith.constant 0 : index
    %c0_13 = arith.constant 0 : index
    %16 = vector.load %arg5[%c0_12, %c0_13] : memref<2x4xf32, #tpu.memory_space<vmem>>, vector<2x4xf32>
    tpu.vector_store %arg5[%c0_12, %c0_13], %15 {strides = array<i32>} : memref<2x4xf32, #tpu.memory_space<vmem>>, vector<2x4xf32>,
    %c0_i32_14 = arith.constant 0 : i32
    %17 = arith.cmpi eq, %arg1, %c0_i32_14 : i32
    %18 = arith.extui %17 : i1 to i32
    %c0_i32_15 = arith.constant 0 : i32
    %19 = arith.cmpi ne, %18, %c0_i32_15 : i32
    scf.if %19 {
      %c0_16 = arith.constant 0 : index
      %c0_17 = arith.constant 0 : index
      %20 = vector.load %arg4[%c0_16, %c0_17] : memref<2x4xf32, #tpu.memory_space<vmem>>, vector<2x4xf32>
      %c0_18 = arith.constant 0 : index
      %c0_19 = arith.constant 0 : index
      %21 = vector.load %arg5[%c0_18, %c0_19] : memref<2x4xf32, #tpu.memory_space<vmem>>, vector<2x4xf32>
      %22 = arith.mulf %20, %20 : vector<2x4xf32>
      %cst_20 = arith.constant 6.250000e-02 : f32
      %23 = vector.broadcast %cst_20 : f32 to vector<2x4xf32>
      %24 = arith.mulf %22, %23 : vector<2x4xf32>
      %25 = arith.subf %21, %24 : vector<2x4xf32>
      %cst_21 = arith.constant 0.000000e+00 : f32
      %26 = vector.broadcast %cst_21 : f32 to vector<2x4xf32>
      %27 = arith.maximumf %25, %26 : vector<2x4xf32>
      %cst_22 = arith.constant 1.500000e+01 : f32
      %28 = vector.broadcast %cst_22 : f32 to vector<2x4xf32>
      %29 = arith.divf %27, %28 : vector<2x4xf32>
      %c0_23 = arith.constant 0 : index
      %c0_24 = arith.constant 0 : index
      %30 = vector.load %arg3[%c0_23, %c0_24] : memref<2x4xf32, #tpu.memory_space<vmem>>, vector<2x4xf32>
      tpu.vector_store %arg3[%c0_23, %c0_24], %29 {strides = array<i32>} : memref<2x4xf32, #tpu.memory_space<vmem>>, vector<2x4xf32>,
    } else {
    }
    return
  }
  func.func @transform_0(%arg0: i32, %arg1: i32) -> (i32, i32, i32) {
    %c0_i32 = arith.constant 0 : i32
    %c0_i32_0 = arith.constant 0 : i32
    return %arg0, %c0_i32, %arg1 : i32, i32, i32
  }
  func.func @transform_1(%arg0: i32, %arg1: i32) -> (i32, i32) {
    %c0_i32 = arith.constant 0 : i32
    %c0_i32_0 = arith.constant 0 : i32
    return %arg0, %c0_i32 : i32, i32
  }
}

</mosaic_0001>

<llo_original>
// kernel: tpu_custom_call.1
$region0: #{tpu_custom_call.1}
  #allocation0 [shape = 'u32[]', space=smem, size = 0x4, offset = 0x4, fixed_abs, tag = 'smem constant byte address 0x4 - core index']
  #allocation1 [shape = 'u32[144,128]{1,0:T(1,128)}', space=vmem, size = 0x12000, scoped, tag = 'internal scratch']
  #allocation2 [shape = 'f32[2,4]{1,0:T(2,128)}', space=vmem, size = 0x400, scoped, tag = 'scratch operand']
  #allocation3 [shape = 'f32[2,4]{1,0:T(2,128)}', space=vmem, size = 0x400, scoped, tag = 'scratch operand']
  #allocation4 [shape = 'f32[2,4]{1,0:T(2,128)}', space=vmem, size = 0x400, scoped, tag = 'scratch operand']
  %s0 = inlined_call_operand.hbm [shape: f32[2,4,16], index: 0, kind: input, shape index: {}]
  %s1 = inlined_call_operand.hbm [shape: f32[2,4], index: 1, kind: output, shape index: {}]
  %s2 = sld [smem:[#allocation0]]
  $region26: #{tpu_custom_call.1} parent=0
    _
  %s4 = ssub.s32 1, %s2
  %s5 = scalar_select 0, %s4, %s2
  $region1: #{tpu_custom_call.1} parent=0
    #allocation5 [shape = 'u8[4096]{0}', space=vmem, size = 0x1000, scoped, tag = 'input window, operand 0, single buffered']
    #allocation6 [shape = 's32[1]{0}', space=sflag, size = 0x4, scoped, tag = 'scoped memory for tpu_custom_call.1']
    #allocation7 [shape = 's32[1]{0}', space=sflag, size = 0x4, scoped, tag = 'scoped memory for tpu_custom_call.1']
    #allocation8 [shape = 'u8[1024]{0}', space=vmem, size = 0x400, scoped, tag = 'output window, operand 0, single buffered']
    %6 = vsyncpa [#allocation6], 0
    %7 = vsyncpa [#allocation7], 0
    // Predicated region
    $region2: #{tpu_custom_call.1} parent=1 // pred_check
      _
    $region3: #{tpu_custom_call.1} parent=1 // pred_check_branch
      %9 = sbr.rel (0) target = $region5
    $region4: #{tpu_custom_call.1} parent=1 // pred_region
      %s11 = ssub.s32 128, 128
      %12 = vsyncadd [#allocation6], %s11
      %s13 = sshll.u32 [#allocation5], 4
      %s14 = int_to_ptr.vmem [resolvable:$true] %s13
      %19 = dma.hbm_to_vmem [thread:$0]  %s0, 128, %s14, [#allocation6], 64, 64, 4
    $region5: #{tpu_custom_call.1} parent=1 // pred_fallthru
      _
    // Predicated region
    $region6: #{tpu_custom_call.1} parent=1 // pred_check
      _
    $region7: #{tpu_custom_call.1} parent=1 // pred_check_branch
      %21 = sbr.rel (0) target = $region9
    $region8: #{tpu_custom_call.1} parent=1 // pred_region
      %22 = dma.done [#allocation6], 128
    $region9: #{tpu_custom_call.1} parent=1 // pred_fallthru
      _
    %v23 = vld [vmem:[#allocation5] sm:$0xf]
    %v24 = vld [vmem:[#allocation5 + $0x4] sm:$0xf]
    %p25 = scmp.eq.s32.totalorder 0, 0
    // Predicated region
    $region10: #{tpu_custom_call.1} parent=1 // pred_check
      %p26 = pneg %p25
    $region11: #{tpu_custom_call.1} parent=1 // pred_check_branch
      %28 = sbr.rel (%p26) target = $region13
    $region12: #{tpu_custom_call.1} parent=1 // pred_region
      %vm29 = vcmask 125952
      %v30 = vsel %vm29, %v23, 0.0
      %31 = vadd.xlane.f32.xlu0 %v30
      %v32 = vpop.xlane.xlu0 %31
      %v33 = vsel %vm29, %v24, 0.0
      %34 = vadd.xlane.f32.xlu0 %v33
      %v35 = vpop.xlane.xlu0 %34
      %v36 = vrcp.pop 16.0
      %v37 = vmul.f32 %v32, %v36
      %v38 = vmul.f32 %v35, %v36
      %v41 = vlaneseq
      %v42 = vand.u32 %v41, 127
      %v43 = vlaneseq
      %v44 = vshrl.u32 %v43, 7
      %v45 = vsub.s32 %v42, %v44
      %v46 = vrot.slane %v37, %v45
      %v47 = vlaneseq
      %v48 = vshrl.u32 %v47, 7
      %v49 = vsub.s32 %v42, %v48
      %v50 = vrot.slane %v38, %v49
      %vm51 = vcmask 1041409
      %v52 = vsel %vm51, %v50, %v46
      %vm54 = vcmask 25600
      %55 = vst.msk [vmem:[#allocation4] sm:$0x3] %vm54, %v52
      %56 = vst.msk [vmem:[#allocation2] sm:$0x3] %vm54, 0.0
      %57 = vst.msk [vmem:[#allocation3] sm:$0x3] %vm54, 0.0
    $region13: #{tpu_custom_call.1} parent=1 // pred_fallthru
      _
    %v58 = vld [vmem:[#allocation4] sm:$0x3]
    %v59 = vlaneseq
    %v60 = vshrl.u32 %v59, 7
    %v61 = vsub.s32 0, %v60
    %v62 = vrot.slane %v58, %v61
    %64 = vbcast.lane.b32.xlu0 %v62, 256
    %v65 = vpop.permute.xlu0 %64
    %v66 = vlaneseq
    %v67 = vshrl.u32 %v66, 7
    %v68 = vsub.s32 1, %v67
    %v69 = vrot.slane %v58, %v68
    %71 = vbcast.lane.b32.xlu0 %v69, 256
    %v72 = vpop.permute.xlu0 %71
    %v73 = vsub.f32 %v23, %v65
    %v74 = vsub.f32 %v24, %v72
    %v75 = vld [vmem:[#allocation2] sm:$0x3]
    %vm76 = vcmask 125952
    %v77 = vsel %vm76, %v73, 0.0
    %78 = vadd.xlane.f32.xlu0 %v77
    %v79 = vpop.xlane.xlu0 %78
    %v80 = vsel %vm76, %v74, 0.0
    %81 = vadd.xlane.f32.xlu0 %v80
    %v82 = vpop.xlane.xlu0 %81
    %v85 = vlaneseq
    %v86 = vand.u32 %v85, 127
    %v87 = vlaneseq
    %v88 = vshrl.u32 %v87, 7
    %v89 = vsub.s32 %v86, %v88
    %v90 = vrot.slane %v79, %v89
    %v91 = vlaneseq
    %v92 = vshrl.u32 %v91, 7
    %v93 = vsub.s32 %v86, %v92
    %v94 = vrot.slane %v82, %v93
    %vm95 = vcmask 1041409
    %v96 = vsel %vm95, %v94, %v90
    %v98 = vadd.f32 %v75, %v96
    %vm99 = vcmask 25600
    %100 = vst.msk [vmem:[#allocation2] sm:$0x3] %vm99, %v98
    %v101 = vld [vmem:[#allocation3] sm:$0x3]
    %v102 = vmul.f32 %v73, %v73
    %v103 = vmul.f32 %v74, %v74
    %v104 = vsel %vm76, %v102, 0.0
    %105 = vadd.xlane.f32.xlu0 %v104
    %v106 = vpop.xlane.xlu0 %105
    %v107 = vsel %vm76, %v103, 0.0
    %108 = vadd.xlane.f32.xlu0 %v107
    %v109 = vpop.xlane.xlu0 %108
    %v112 = vlaneseq
    %v113 = vshrl.u32 %v112, 7
    %v114 = vsub.s32 %v86, %v113
    %v115 = vrot.slane %v106, %v114
    %v116 = vlaneseq
    %v117 = vshrl.u32 %v116, 7
    %v118 = vsub.s32 %v86, %v117
    %v119 = vrot.slane %v109, %v118
    %v120 = vsel %vm95, %v119, %v115
    %v122 = vadd.f32 %v101, %v120
    %123 = vst.msk [vmem:[#allocation3] sm:$0x3] %vm99, %v122
    // Predicated region
    $region14: #{tpu_custom_call.1} parent=1 // pred_check
      %p124 = pneg %p25
    $region15: #{tpu_custom_call.1} parent=1 // pred_check_branch
      %126 = sbr.rel (%p124) target = $region17
    $region16: #{tpu_custom_call.1} parent=1 // pred_region
      %v127 = vld [vmem:[#allocation2] sm:$0x3]
      %v128 = vld [vmem:[#allocation3] sm:$0x3]
      %v129 = vmul.f32 %v127, %v127
      %v130 = vmul.f32 %v129, 0.0625
      %v131 = vsub.f32 %v128, %v130
      %v132 = vmax.f32 %v131, 0.0
      %v133 = vrcp.pop 15.0
      %v134 = vmul.f32 %v132, %v133
      %135 = vst.msk [vmem:[#allocation8] sm:$0x3] %vm99, %v134
    $region17: #{tpu_custom_call.1} parent=1 // pred_fallthru
      _
    // Predicated region
    $region18: #{tpu_custom_call.1} parent=1 // pred_check
      _
    $region19: #{tpu_custom_call.1} parent=1 // pred_check_branch
      %137 = sbr.rel (0) target = $region21
    $region20: #{tpu_custom_call.1} parent=1 // pred_region
      %s139 = ssub.s32 32, 32
      %140 = vsyncadd [#allocation7], %s139
      %s142 = sshll.u32 [#allocation8], 4
      %s143 = int_to_ptr.vmem [resolvable:$true] %s142
      %145 = dma.vmem_to_hbm [thread:$0]  %s143, 32, %s1, [#allocation7]
    $region21: #{tpu_custom_call.1} parent=1 // pred_fallthru
      _
    // Predicated region
    $region22: #{tpu_custom_call.1} parent=1 // pred_check
      _
    $region23: #{tpu_custom_call.1} parent=1 // pred_check_branch
      %147 = sbr.rel (0) target = $region25
    $region24: #{tpu_custom_call.1} parent=1 // pred_region
      %148 = dma.done [#allocation7], 32
    $region25: #{tpu_custom_call.1} parent=1 // pred_fallthru
      _
    %149 = vsyncpa [#allocation6], 1
    %150 = vsyncpa [#allocation7], 1

</llo_original>
